<compile_context>
chip_gen: v5e
topology: v5e:2x2
jax: 0.10.0
libtpu: 0.0.40
codegen_flags: <defaults>
</compile_context>

<pallas_src>
import math
import functools

import jax
import jax.numpy as jnp
from jax.experimental import pallas as pl
from jax.experimental.pallas import tpu as pltpu


def make_positional_encoding(d_model: int, max_len: int = 20) -> jnp.ndarray:
    """Deterministic sin/cos PE table, same formula as the PyTorch __init__."""
    position = jnp.arange(0, max_len, dtype=jnp.float32)[:, None]            # (max_len, 1)
    div_term = jnp.exp(
        jnp.arange(0.0, d_model, 2.0, dtype=jnp.float32)
        * -(math.log(10000.0) / d_model)
    )                                                                         # (d_model/2,)
    pe = jnp.zeros((max_len, d_model), dtype=jnp.float32)
    pe = pe.at[:, 0::2].set(jnp.sin(position * div_term))
    pe = pe.at[:, 1::2].set(jnp.cos(position * div_term))
    return pe


# ---------------------------------------------------------------------------
# Kernels
# ---------------------------------------------------------------------------

def _pe_add_kernel(x_ref, pe_ref, o_ref):
    # x_ref / o_ref: (tb, tl) lane-dense block; pe_ref: (1, tl) broadcasts over
    # the row (batch) axis.
    o_ref[...] = (x_ref[...].astype(jnp.float32) + pe_ref[...]).astype(o_ref.dtype)


def _pe_add_dropout_kernel(seed_ref, x_ref, pe_ref, o_ref, *,
                           thr: int, inv_keep: float, sd_total: int):
    # Inverted dropout.  Random bits come from a counter-based hash of the
    # global flat element index mixed with the seed: mask is independent of
    # the tiling and different seeds give unrelated streams (fixes the
    # per-tile stream-overlap concern of the previous pltpu.prng_* version).
    tb, tl = x_ref.shape
    row0 = (pl.program_id(0) * tb).astype(jnp.uint32)
    col0 = (pl.program_id(1) * tl).astype(jnp.uint32)
    r = jax.lax.broadcasted_iota(jnp.int32, (tb, tl), 0).astype(jnp.uint32)
    c = jax.lax.broadcasted_iota(jnp.int32, (tb, tl), 1).astype(jnp.uint32)
    flat = (row0 + r) * jnp.uint32(sd_total & 0xFFFFFFFF) + (col0 + c)

    seed_u = seed_ref[0].astype(jnp.uint32)
    h = flat ^ (seed_u * jnp.uint32(0x9E3779B9))
    # lowbias32 integer hash (xor-shift-multiply), all cheap VPU ops.
    h = (h ^ (h >> 16)) * jnp.uint32(0x7FEB352D)
    h = (h ^ (h >> 15)) * jnp.uint32(0x846CA68B)
    h = h ^ (h >> 16)

    keep = h >= jnp.uint32(thr)                       # P(keep) = 1 - p
    y = x_ref[...].astype(jnp.float32) + pe_ref[...]
    o_ref[...] = jnp.where(keep, y * jnp.float32(inv_keep), 0.0).astype(o_ref.dtype)


# ---------------------------------------------------------------------------
# Tiling heuristics (VMEM-budgeted, dtype-aware, pipeline-friendly)
# ---------------------------------------------------------------------------

_BLOCK_BYTE_BUDGET = 16 * 1024 * 1024    # live block buffers (x + out double-buffered)
_VMEM_LIMIT_BYTES = 32 * 1024 * 1024     # safe on v5e/v6e/v7x; > v5e's 16 MiB default
_MIN_BYTES_FOR_TILING = 4 * 1024 * 1024  # below this, one grid step is fine


def _choose_tiles(B: int, SD: int, itemsize: int):
    """Pick (row_tile, lane_tile) for the flattened (B, SD) layout."""
    sub = max(8, 32 // itemsize)          # sublane multiple: f32 8, bf16 16, int8 32

    # Lane tile: multiple of 128 (unmasked stores) or the full extent.
    if SD % 128 != 0 or SD <= 32768:
        tl = SD
    else:
        tl = 8192

    # Row tile from the VMEM budget: ~ (4*tb + 2) * tl * itemsize live bytes
    # with default double-buffering of the x and out blocks (+ the pe block).
    tb_cap = max(1, (_BLOCK_BYTE_BUDGET // (tl * itemsize) - 2) // 4)
    if B <= tb_cap:
        tb = B
    else:
        tb = max(sub, (tb_cap // sub) * sub)

    # Keep >= 4 grid steps for non-tiny tensors so prefetch/writeback overlaps
    # compute, and so the parallel grid shards across both v7x TensorCores.
    total_bytes = B * SD * itemsize
    if total_bytes > _MIN_BYTES_FOR_TILING:
        while pl.cdiv(B, tb) * pl.cdiv(SD, tl) < 4:
            if tb > sub:
                tb = max(sub, (tb // 2 // sub) * sub)
            elif SD % 128 == 0 and tl >= 256:
                tl = max(128, (tl // 2 // 128) * 128)
            else:
                break
    return tb, tl


# ---------------------------------------------------------------------------
# Forward
# ---------------------------------------------------------------------------

def positional_encoding_forward(x, pe, *, p: float = 0.1, train: bool = False,
                                seed: int = 0):
    """x: (B, S, D). pe: (max_len, D). Returns (B, S, D) = dropout(x + pe[:S])."""
    B, S, D = x.shape
    SD = S * D

    # Glue in plain JAX: lane-dense flatten (row-major, so x2[b, s*D+d] = x[b,s,d]).
    x2 = x.reshape(B, SD)
    pe2 = pe[:S, :].astype(jnp.float32).reshape(1, SD)

    itemsize = jnp.dtype(x.dtype).itemsize
    tb, tl = _choose_tiles(B, SD, itemsize)
    grid = (pl.cdiv(B, tb), pl.cdiv(SD, tl))

    out_shape = jax.ShapeDtypeStruct((B, SD), x.dtype)
    cparams = pltpu.CompilerParams(
        dimension_semantics=("parallel", "parallel"),
        vmem_limit_bytes=_VMEM_LIMIT_BYTES,
    )

    if train and p > 0.0:
        assert 0.0 < p < 1.0, "dropout probability must be in [0, 1)"
        # TODO(synk): in-kernel counter-hash PRNG is deterministic per seed but
        # not bitwise identical to torch's RNG stream.
        thr = min(int(round(p * 2.0 ** 32)), 2 ** 32 - 1)
        kernel = functools.partial(_pe_add_dropout_kernel, thr=thr,
                                   inv_keep=float(1.0 / (1.0 - p)), sd_total=SD)
        seed_arr = jnp.array([seed], dtype=jnp.int32)
        grid_spec = pltpu.PrefetchScalarGridSpec(
            num_scalar_prefetch=1,             # seed lands in SMEM
            grid=grid,
            in_specs=[pl.BlockSpec((tb, tl), lambda i, j, *_: (i, j)),
                      pl.BlockSpec((1, tl), lambda i, j, *_: (0, j))],
            out_specs=pl.BlockSpec((tb, tl), lambda i, j, *_: (i, j)),
        )
        out2 = pl.pallas_call(
            kernel,
            out_shape=out_shape,
            grid_spec=grid_spec,
            compiler_params=cparams,
            input_output_aliases={1: 0},       # operand 0 is the seed
        )(seed_arr, x2, pe2)
    else:
        # Inference path: no scalar prefetch, no PRNG — pure broadcast add.
        grid_spec = pl.GridSpec(
            grid=grid,
            in_specs=[pl.BlockSpec((tb, tl), lambda i, j: (i, j)),
                      pl.BlockSpec((1, tl), lambda i, j: (0, j))],
            out_specs=pl.BlockSpec((tb, tl), lambda i, j: (i, j)),
        )
        out2 = pl.pallas_call(
            _pe_add_kernel,
            out_shape=out_shape,
            grid_spec=grid_spec,
            compiler_params=cparams,
            input_output_aliases={0: 0},
        )(x2, pe2)

    return out2.reshape(B, S, D)


if __name__ == "__main__":
    # Shapes implied by the module: batch=2, seq=8, d_model=32, max_len=20.
    B, S, D, MAX_LEN = 2, 8, 32, 20
    key = jax.random.PRNGKey(0)
    x = jax.random.normal(key, (B, S, D), dtype=jnp.float32)

    pe = make_positional_encoding(D, MAX_LEN)
    ref = x + pe[:S, :][None, :, :]

    # Eval-mode forward (dropout is identity, matching module.eval()).
    out = positional_encoding_forward(x, pe, p=0.1, train=False)
    out = jax.block_until_ready(out)
    assert out.shape == (B, S, D)
    assert jnp.allclose(out, ref, atol=1e-6, rtol=1e-6), "eval mismatch vs reference"

    # Training-mode smoke test: surviving elements must equal ref / (1 - p),
    # dropped elements must be exactly zero.
    p = 0.1
    out_tr = positional_encoding_forward(x, pe, p=p, train=True, seed=123)
    out_tr = jax.block_until_ready(out_tr)
    assert out_tr.shape == (B, S, D)
    kept = out_tr != 0.0
    assert jnp.allclose(jnp.where(kept, out_tr, 0.0),
                        jnp.where(kept, ref / (1.0 - p), 0.0),
                        atol=1e-5, rtol=1e-5), "train-mode mismatch vs reference"
    drop_frac = float(1.0 - jnp.mean(kept.astype(jnp.float32)))
    assert 0.0 <= drop_frac <= 0.5, f"implausible dropout fraction {drop_frac}"

    print("KERNEL_OK")
</pallas_src>

<mosaic_0001>
module attributes {stable_mosaic.version = 11 : i64} {
  func.func @_pe_add_kernel(%arg0: i32, %arg1: i32, %arg2: memref<2x256xf32, #tpu.memory_space<vmem>>, %arg3: memref<1x256xf32, #tpu.memory_space<vmem>>, %arg4: memref<2x256xf32, #tpu.memory_space<vmem>>) attributes {dimension_semantics = [#tpu.dimension_semantics<parallel>, #tpu.dimension_semantics<parallel>], iteration_bounds = array<i64: 1, 1>, scalar_prefetch = 0 : i64, scratch_operands = 0 : i64, tpu.core_type = #tpu.core_type<tc>, window_params = [{transform_indices = @transform_0, window_bounds = array<i64: 2, 256>}, {transform_indices = @transform_1, window_bounds = array<i64: 1, 256>}, {transform_indices = @transform_2, window_bounds = array<i64: 2, 256>}]} {
    %c0 = arith.constant 0 : index
    %c0_0 = arith.constant 0 : index
    %0 = vector.load %arg2[%c0, %c0_0] : memref<2x256xf32, #tpu.memory_space<vmem>>, vector<2x256xf32>
    %c0_1 = arith.constant 0 : index
    %c0_2 = arith.constant 0 : index
    %1 = vector.load %arg3[%c0_1, %c0_2] : memref<1x256xf32, #tpu.memory_space<vmem>>, vector<1x256xf32>
    %2 = vector.broadcast %1 : vector<1x256xf32> to vector<2x256xf32>
    %3 = arith.addf %0, %2 : vector<2x256xf32>
    %c0_3 = arith.constant 0 : index
    %c0_4 = arith.constant 0 : index
    %4 = vector.load %arg4[%c0_3, %c0_4] : memref<2x256xf32, #tpu.memory_space<vmem>>, vector<2x256xf32>
    tpu.vector_store %arg4[%c0_3, %c0_4], %3 {strides = array<i32>} : memref<2x256xf32, #tpu.memory_space<vmem>>, vector<2x256xf32>,
    return
  }
  func.func @transform_0(%arg0: i32, %arg1: i32) -> (i32, i32) {
    %c0_i32 = arith.constant 0 : i32
    return %arg0, %arg1 : i32, i32
  }
  func.func @transform_1(%arg0: i32, %arg1: i32) -> (i32, i32) {
    %c0_i32 = arith.constant 0 : i32
    %c0_i32_0 = arith.constant 0 : i32
    return %c0_i32, %arg1 : i32, i32
  }
  func.func @transform_2(%arg0: i32, %arg1: i32) -> (i32, i32) {
    %c0_i32 = arith.constant 0 : i32
    return %arg0, %arg1 : i32, i32
  }
}

</mosaic_0001>

<llo_original>
// kernel: tpu_custom_call.1
$region0: #{tpu_custom_call.1}
  #allocation0 [shape = 'u32[]', space=smem, size = 0x4, offset = 0x4, fixed_abs, tag = 'smem constant byte address 0x4 - core index']
  #allocation1 [shape = 'u32[72,128]{1,0:T(1,128)}', space=vmem, size = 0x9000, scoped, tag = 'internal scratch']
  %s0 = inlined_call_operand.hbm [shape: f32[2,256], index: 0, kind: input, shape index: {}, may-alias: {0,2}]
  %s1 = inlined_call_operand.vmem [shape: f32[1,256], index: 1, kind: input, shape index: {}]
  %s2 = inlined_call_operand.hbm [shape: f32[2,256], index: 2, kind: output, shape index: {}, may-alias: {0,2}]
  %s3 = sld [smem:[#allocation0]]
  $region22: #{tpu_custom_call.1} parent=0
    _
  %s5 = ssub.s32 1, %s3
  %s6 = scalar_select 0, %s5, %s3
  $region1: #{tpu_custom_call.1} parent=0
    #allocation2 [shape = 'u8[2048]{0}', space=vmem, size = 0x800, scoped, tag = 'input window, operand 0, single buffered']
    #allocation3 [shape = 's32[1]{0}', space=sflag, size = 0x4, scoped, tag = 'scoped memory for tpu_custom_call.1']
    #allocation4 [shape = 's32[1]{0}', space=sflag, size = 0x4, scoped, tag = 'scoped memory for tpu_custom_call.1']
    #allocation5 [shape = 'u8[2048]{0}', space=vmem, size = 0x800, scoped, tag = 'output window, operand 0, single buffered']
    %7 = vsyncpa [#allocation3], 0
    %8 = vsyncpa [#allocation4], 0
    // Predicated region
    $region2: #{tpu_custom_call.1} parent=1 // pred_check
      _
    $region3: #{tpu_custom_call.1} parent=1 // pred_check_branch
      %10 = sbr.rel (0) target = $region5
    $region4: #{tpu_custom_call.1} parent=1 // pred_region
      %12 = vsyncadd [#allocation3], 0
      %s14 = sshll.u32 %s0, 4
      %s15 = int_to_ptr.hbm [resolvable:$true] %s14
      %s16 = sshll.u32 [#allocation2], 4
      %s17 = int_to_ptr.vmem [resolvable:$true] %s16
      %19 = dma.hbm_to_vmem [thread:$0]  %s15, 64, %s17, [#allocation3]
    $region5: #{tpu_custom_call.1} parent=1 // pred_fallthru
      _
    // Predicated region
    $region6: #{tpu_custom_call.1} parent=1 // pred_check
      _
    $region7: #{tpu_custom_call.1} parent=1 // pred_check_branch
      %21 = sbr.rel (0) target = $region9
    $region8: #{tpu_custom_call.1} parent=1 // pred_region
      _
    $region9: #{tpu_custom_call.1} parent=1 // pred_fallthru
      _
    // Predicated region
    $region10: #{tpu_custom_call.1} parent=1 // pred_check
      _
    $region11: #{tpu_custom_call.1} parent=1 // pred_check_branch
      %23 = sbr.rel (0) target = $region13
    $region12: #{tpu_custom_call.1} parent=1 // pred_region
      %25 = dma.done [#allocation3], 64
    $region13: #{tpu_custom_call.1} parent=1 // pred_fallthru
      _
    %v26 = vld [vmem:[#allocation2] sm:$0xf]
    %v27 = vld [vmem:[%s1] sm:$0x3]
    %v29 = vperm.slane %v27, 0
    %v30 = vperm.slane %v27, 1
    %v31 = vrot.slane %v30, 6
    %vm32 = vcmask 1041408
    %v33 = vsel %vm32, %v29, %v31
    %v35 = vadd.f32 %v26, %v33
    %36 = vst [vmem:[#allocation5] sm:$0xf] %v35
    // Predicated region
    $region14: #{tpu_custom_call.1} parent=1 // pred_check
      _
    $region15: #{tpu_custom_call.1} parent=1 // pred_check_branch
      %38 = sbr.rel (0) target = $region17
    $region16: #{tpu_custom_call.1} parent=1 // pred_region
      %40 = vsyncadd [#allocation4], 0
      %s42 = sshll.u32 [#allocation5], 4
      %s43 = int_to_ptr.vmem [resolvable:$true] %s42
      %s44 = sshll.u32 %s2, 4
      %s45 = int_to_ptr.hbm [resolvable:$true] %s44
      %47 = dma.vmem_to_hbm [thread:$0]  %s43, 64, %s45, [#allocation4]
    $region17: #{tpu_custom_call.1} parent=1 // pred_fallthru
      _
    // Predicated region
    $region18: #{tpu_custom_call.1} parent=1 // pred_check
      _
    $region19: #{tpu_custom_call.1} parent=1 // pred_check_branch
      %49 = sbr.rel (0) target = $region21
    $region20: #{tpu_custom_call.1} parent=1 // pred_region
      %51 = dma.done [#allocation4], 64
    $region21: #{tpu_custom_call.1} parent=1 // pred_fallthru
      _
    %52 = vsyncpa [#allocation3], 1
    %53 = vsyncpa [#allocation4], 1

</llo_original>
